<compile_context>
chip_gen: v5e
topology: v5e:2x2
jax: 0.10.0
libtpu: 0.0.40
codegen_flags: <defaults>
</compile_context>

<pallas_src>
import jax
import jax.numpy as jnp
from jax.experimental import pallas as pl
from jax.experimental.pallas import tpu as pltpu


def _round_up(x, m):
    return (x + m - 1) // m * m


def _make_gcn_kernel(tk, xw_resident):
    """out[i] += A[i, k] @ XW[k]; bias added once in the k==last epilogue."""

    def kernel(a_ref, xw_ref, b_ref, o_ref):
        k = pl.program_id(1)

        @pl.when(k == 0)
        def _init():
            o_ref[...] = jnp.zeros_like(o_ref)

        if xw_resident:
            # XW lives fully in VMEM (constant block index => DMA'd once);
            # slice out the k-th (tk, F_out) strip.
            start = pl.multiple_of(k * tk, tk)
            xw = xw_ref[pl.ds(start, tk), :]
        else:
            xw = xw_ref[...]

        # bf16 x bf16 -> f32 accumulate on the MXU, straight into the
        # revisited output block (no scratch, no epilogue matmul).
        o_ref[...] += jnp.dot(a_ref[...], xw,
                              preferred_element_type=jnp.float32)

        @pl.when(k == pl.num_programs(1) - 1)
        def _finalize():
            o_ref[...] += b_ref[...]

    return kernel


def build_gcn_adjacency(edge_index, edge_weight, num_nodes, *,
                        padded_shape=None, dtype=jnp.float32, fill_value=1.0):
    """Dense symmetric-normalized adjacency matching PyG gcn_norm with
    add_remaining_self_loops: every original edge (including duplicate self
    loops) is kept as-is; only nodes without any self loop get `fill_value`.
    Built directly into a `padded_shape` buffer of `dtype` so no second
    full-N^2 pad/cast pass is needed before the kernel."""
    src, tgt = edge_index[0], edge_index[1]
    w = edge_weight.astype(jnp.float32)
    is_loop = src == tgt

    # Which nodes already have at least one self loop.
    has_loop = jnp.zeros((num_nodes,), jnp.bool_).at[
        jnp.where(is_loop, src, num_nodes)].set(True, mode="drop")
    added_loop_w = jnp.where(has_loop, 0.0, fill_value)        # per-node add

    # Degree over the target index (flow = source_to_target), incl. added loops.
    deg = jnp.zeros((num_nodes,), jnp.float32).at[tgt].add(w) + added_loop_w
    deg_inv_sqrt = jnp.where(deg > 0, jax.lax.rsqrt(deg), 0.0)

    # Per-edge normalized weights (all original edges, self loops included).
    norm_e = deg_inv_sqrt[src] * w * deg_inv_sqrt[tgt]
    diag_w = deg_inv_sqrt * added_loop_w * deg_inv_sqrt        # added self loops

    rows, cols = (padded_shape if padded_shape is not None
                  else (num_nodes, num_nodes))
    node_idx = jnp.arange(num_nodes)
    a_hat = jnp.zeros((rows, cols), dtype)
    a_hat = a_hat.at[tgt, src].add(norm_e.astype(dtype))
    a_hat = a_hat.at[node_idx, node_idx].add(diag_w.astype(dtype))
    return a_hat


def one_layer_gcn(x, edge_index, edge_weight, weight, bias, *,
                  block_m=512, block_k=1024,
                  xw_resident_budget_bytes=8 * 1024 * 1024):
    """OneLayerGCN forward: GCNConv(x, edge_index, edge_weight).

    x: [N, F_in], edge_index: [2, E] (src, tgt), edge_weight: [E],
    weight: [F_in, F_out] (torch W^T), bias: [F_out]  ->  [N, F_out].
    """
    n, f_in = x.shape
    f_out = weight.shape[1]
    f_out_p = _round_up(f_out, 128)            # lane-dense output stores

    n_128 = _round_up(n, 128)
    tm = min(block_m, n_128)
    # v7x megacore: keep >= 2 row tiles (the "parallel" axis shards across the
    # two TensorCores) whenever the graph spans more than one 128-row tile.
    if tm == n_128 and n_128 >= 256:
        tm = _round_up(n_128 // 2, 128)
    tk = min(block_k, n_128)

    n_pad_m = _round_up(n, tm)                 # A rows / output rows
    n_pad_k = _round_up(n, tk)                 # A cols / XW rows

    # Adjacency built straight into the padded bf16 layout the kernel reads.
    a_hat = build_gcn_adjacency(edge_index, edge_weight, n,
                                padded_shape=(n_pad_m, n_pad_k),
                                dtype=jnp.bfloat16)

    # Small feature transform once in the wrapper: XW = X @ W  (f32 -> bf16).
    xw = x.astype(jnp.float32) @ weight.astype(jnp.float32)
    xw_p = jnp.zeros((n_pad_k, f_out_p), jnp.bfloat16).at[:n, :f_out].set(
        xw.astype(jnp.bfloat16))
    b_p = jnp.zeros((1, f_out_p), jnp.float32).at[:, :f_out].set(
        bias.reshape(1, f_out).astype(jnp.float32))

    grid = (n_pad_m // tm, n_pad_k // tk)

    # Keep XW fully VMEM-resident unless (double-buffered) it would crowd the
    # v7x 64 MiB budget; then fall back to streaming a (tk, F_out) strip per k.
    xw_resident = 2 * n_pad_k * f_out_p * 2 <= xw_resident_budget_bytes
    if xw_resident:
        xw_spec = pl.BlockSpec((n_pad_k, f_out_p), lambda i, k: (0, 0))
    else:
        xw_spec = pl.BlockSpec((tk, f_out_p), lambda i, k: (k, 0))

    flops = 2 * n_pad_m * n_pad_k * f_out_p
    xw_bytes = (n_pad_k * f_out_p * 2 if xw_resident
                else grid[0] * n_pad_k * f_out_p * 2)
    bytes_accessed = (n_pad_m * n_pad_k * 2          # A_hat (bf16), read once
                      + xw_bytes
                      + b_p.size * 4
                      + n_pad_m * f_out_p * 4)       # output writeback
    cost = pl.CostEstimate(flops=flops, transcendentals=0,
                           bytes_accessed=int(bytes_accessed))

    out_padded = pl.pallas_call(
        _make_gcn_kernel(tk, xw_resident),
        out_shape=jax.ShapeDtypeStruct((n_pad_m, f_out_p), jnp.float32),
        grid_spec=pltpu.PrefetchScalarGridSpec(
            num_scalar_prefetch=0,
            grid=grid,
            in_specs=[
                pl.BlockSpec((tm, tk), lambda i, k: (i, k)),      # A_hat tile
                xw_spec,                                          # XW
                pl.BlockSpec((1, f_out_p), lambda i, k: (0, 0)),  # bias
            ],
            out_specs=pl.BlockSpec((tm, f_out_p), lambda i, k: (i, 0)),
        ),
        compiler_params=pltpu.CompilerParams(
            dimension_semantics=("parallel", "arbitrary"),
            vmem_limit_bytes=32 * 1024 * 1024,
        ),
        cost_estimate=cost,
    )(a_hat, xw_p, b_p)

    return out_padded[:n, :f_out]


if __name__ == "__main__":
    key = jax.random.PRNGKey(0)
    k_x, k_w, k_e = jax.random.split(key, 3)

    num_nodes = 8       # N
    input_dim = 16      # F_in
    output_dim = 32     # F_out
    num_edges = 20      # E

    # Node features.
    x = jax.random.normal(k_x, (num_nodes, input_dim), dtype=jnp.float32)

    # Random directed edges + positive edge weights.
    edge_index = jax.random.randint(k_e, (2, num_edges), 0, num_nodes,
                                    dtype=jnp.int32)
    edge_weight = jnp.abs(
        jax.random.normal(jax.random.fold_in(k_e, 1), (num_edges,),
                          dtype=jnp.float32)) + 0.1

    # Deterministic parameter init (glorot-style weight, zero bias, as GCNConv).
    limit = (6.0 / (input_dim + output_dim)) ** 0.5
    weight = jax.random.uniform(k_w, (input_dim, output_dim),
                                minval=-limit, maxval=limit, dtype=jnp.float32)
    bias = jnp.zeros((output_dim,), jnp.float32)

    out = one_layer_gcn(x, edge_index, edge_weight, weight, bias)
    out = jax.block_until_ready(out)

    # Pure-JAX reference at matching (bf16 MXU-input) precision.
    a_ref = build_gcn_adjacency(edge_index, edge_weight, num_nodes,
                                dtype=jnp.bfloat16).astype(jnp.float32)
    xw_ref = (x @ weight).astype(jnp.bfloat16).astype(jnp.float32)
    ref = a_ref @ xw_ref + bias[None, :]

    assert out.shape == (num_nodes, output_dim)
    assert jnp.allclose(out, ref, atol=2e-2, rtol=2e-2), float(
        jnp.max(jnp.abs(out - ref)))

    print("KERNEL_OK")
</pallas_src>

<mosaic_0001>
module attributes {stable_mosaic.version = 11 : i64} {
  func.func @kernel(%arg0: i32, %arg1: i32, %arg2: memref<128x128xbf16, #tpu.memory_space<vmem>>, %arg3: memref<128x128xbf16, #tpu.memory_space<vmem>>, %arg4: memref<1x128xf32, #tpu.memory_space<vmem>>, %arg5: memref<128x128xf32, #tpu.memory_space<vmem>>) attributes {dimension_semantics = [#tpu.dimension_semantics<parallel>, #tpu.dimension_semantics<arbitrary>], iteration_bounds = array<i64: 1, 1>, scalar_prefetch = 0 : i64, scratch_operands = 0 : i64, tpu.core_type = #tpu.core_type<tc>, window_params = [{transform_indices = @transform_0, window_bounds = array<i64: 128, 128>}, {pipeline_mode = #tpu.pipeline_mode<synchronous>, transform_indices = @transform_1, window_bounds = array<i64: 128, 128>}, {pipeline_mode = #tpu.pipeline_mode<synchronous>, transform_indices = @transform_2, window_bounds = array<i64: 1, 128>}, {transform_indices = @transform_3, window_bounds = array<i64: 128, 128>}]} {
    %c0_i32 = arith.constant 0 : i32
    %0 = arith.cmpi eq, %arg1, %c0_i32 : i32
    %1 = arith.extui %0 : i1 to i32
    %c0_i32_0 = arith.constant 0 : i32
    %2 = arith.cmpi ne, %1, %c0_i32_0 : i32
    scf.if %2 {
      %cst_9 = arith.constant 0.000000e+00 : f32
      %15 = vector.broadcast %cst_9 : f32 to vector<128x128xf32>
      %c0_10 = arith.constant 0 : index
      %c0_11 = arith.constant 0 : index
      %16 = vector.load %arg5[%c0_10, %c0_11] : memref<128x128xf32, #tpu.memory_space<vmem>>, vector<128x128xf32>
      tpu.vector_store %arg5[%c0_10, %c0_11], %15 {strides = array<i32>} : memref<128x128xf32, #tpu.memory_space<vmem>>, vector<128x128xf32>,
    } else {
    }
    %c128_i32 = arith.constant 128 : i32
    %3 = arith.muli %arg1, %c128_i32 : i32
    %4 = tpu.assume_multiple %3, 128 : i32
    %5 = arith.index_cast %4 : i32 to index
    %c0 = arith.constant 0 : index
    %6 = vector.load %arg3[%5, %c0] : memref<128x128xbf16, #tpu.memory_space<vmem>>, vector<128x128xbf16>
    %c0_1 = arith.constant 0 : index
    %c0_2 = arith.constant 0 : index
    %7 = vector.load %arg5[%c0_1, %c0_2] : memref<128x128xf32, #tpu.memory_space<vmem>>, vector<128x128xf32>
    %c0_3 = arith.constant 0 : index
    %c0_4 = arith.constant 0 : index
    %8 = vector.load %arg2[%c0_3, %c0_4] : memref<128x128xbf16, #tpu.memory_space<vmem>>, vector<128x128xbf16>
    %cst = arith.constant dense<0.000000e+00> : vector<128x128xf32>
    %9 = tpu.matmul %8, %6, %cst {dimension_numbers = #tpu.dot_dimension_numbers<[1], [0], [0], [1], [0, 0, 1, 1], [], []>} : vector<128x128xbf16>, vector<128x128xbf16>, vector<128x128xf32> -> vector<128x128xf32>
    %10 = arith.addf %7, %9 : vector<128x128xf32>
    %c0_5 = arith.constant 0 : index
    %c0_6 = arith.constant 0 : index
    %11 = vector.load %arg5[%c0_5, %c0_6] : memref<128x128xf32, #tpu.memory_space<vmem>>, vector<128x128xf32>
    tpu.vector_store %arg5[%c0_5, %c0_6], %10 {strides = array<i32>} : memref<128x128xf32, #tpu.memory_space<vmem>>, vector<128x128xf32>,
    %c0_i32_7 = arith.constant 0 : i32
    %12 = arith.cmpi eq, %arg1, %c0_i32_7 : i32
    %13 = arith.extui %12 : i1 to i32
    %c0_i32_8 = arith.constant 0 : i32
    %14 = arith.cmpi ne, %13, %c0_i32_8 : i32
    scf.if %14 {
      %c0_9 = arith.constant 0 : index
      %c0_10 = arith.constant 0 : index
      %15 = vector.load %arg5[%c0_9, %c0_10] : memref<128x128xf32, #tpu.memory_space<vmem>>, vector<128x128xf32>
      %c0_11 = arith.constant 0 : index
      %c0_12 = arith.constant 0 : index
      %16 = vector.load %arg4[%c0_11, %c0_12] : memref<1x128xf32, #tpu.memory_space<vmem>>, vector<1x128xf32>
      %17 = vector.broadcast %16 : vector<1x128xf32> to vector<128x128xf32>
      %18 = arith.addf %15, %17 : vector<128x128xf32>
      %c0_13 = arith.constant 0 : index
      %c0_14 = arith.constant 0 : index
      %19 = vector.load %arg5[%c0_13, %c0_14] : memref<128x128xf32, #tpu.memory_space<vmem>>, vector<128x128xf32>
      tpu.vector_store %arg5[%c0_13, %c0_14], %18 {strides = array<i32>} : memref<128x128xf32, #tpu.memory_space<vmem>>, vector<128x128xf32>,
    } else {
    }
    return
  }
  func.func @transform_0(%arg0: i32, %arg1: i32) -> (i32, i32) {
    %c0_i32 = arith.constant 0 : i32
    return %arg0, %arg1 : i32, i32
  }
  func.func @transform_1(%arg0: i32, %arg1: i32) -> (i32, i32) {
    %c0_i32 = arith.constant 0 : i32
    %c0_i32_0 = arith.constant 0 : i32
    %c0_i32_1 = arith.constant 0 : i32
    return %c0_i32, %c0_i32_0 : i32, i32
  }
  func.func @transform_2(%arg0: i32, %arg1: i32) -> (i32, i32) {
    %c0_i32 = arith.constant 0 : i32
    %c0_i32_0 = arith.constant 0 : i32
    %c0_i32_1 = arith.constant 0 : i32
    return %c0_i32, %c0_i32_0 : i32, i32
  }
  func.func @transform_3(%arg0: i32, %arg1: i32) -> (i32, i32) {
    %c0_i32 = arith.constant 0 : i32
    %c0_i32_0 = arith.constant 0 : i32
    return %arg0, %c0_i32 : i32, i32
  }
}

</mosaic_0001>

<llo_original>
// kernel: tpu_custom_call.1
$region0: #{tpu_custom_call.1}
  #allocation0 [shape = 'u32[]', space=smem, size = 0x4, offset = 0x4, fixed_abs, tag = 'smem constant byte address 0x4 - core index']
  #allocation1 [shape = 'u32[72,128]{1,0:T(1,128)}', space=vmem, size = 0x9000, scoped, tag = 'internal scratch']
  %s0 = inlined_call_operand.hbm [shape: bf16[128,128], index: 0, kind: input, shape index: {}]
  %s1 = inlined_call_operand.hbm [shape: bf16[128,128], index: 1, kind: input, shape index: {}]
  %s2 = inlined_call_operand.vmem [shape: f32[1,128], index: 2, kind: input, shape index: {}]
  %s3 = inlined_call_operand.hbm [shape: f32[128,128], index: 3, kind: output, shape index: {}]
  %s4 = sld [smem:[#allocation0]]
  $region38: #{tpu_custom_call.1} parent=0
    _
  %s6 = ssub.s32 1, %s4
  %s7 = scalar_select 0, %s6, %s4
  $region1: #{tpu_custom_call.1} parent=0
    #allocation2 [shape = 'u8[32768]{0}', space=vmem, size = 0x8000, scoped, tag = 'input window, operand 0, single buffered']
    #allocation3 [shape = 's32[1]{0}', space=sflag, size = 0x4, scoped, tag = 'scoped memory for tpu_custom_call.1']
    #allocation4 [shape = 's32[1]{0}', space=sflag, size = 0x4, scoped, tag = 'scoped memory for tpu_custom_call.1']
    #allocation5 [shape = 'u8[32768]{0}', space=vmem, size = 0x8000, scoped, tag = 'input window, operand 1, single buffered']
    #allocation6 [shape = 's32[1]{0}', space=sflag, size = 0x4, scoped, tag = 'scoped memory for tpu_custom_call.1']
    #allocation7 [shape = 'u8[65536]{0}', space=vmem, size = 0x10000, scoped, tag = 'output window, operand 0, single buffered']
    %8 = vsyncpa [#allocation3], 0
    %9 = vsyncpa [#allocation6], 0
    %10 = vsyncpa [#allocation4], 0
    // Predicated region
    $region2: #{tpu_custom_call.1} parent=1 // pred_check
      _
    $region3: #{tpu_custom_call.1} parent=1 // pred_check_branch
      %12 = sbr.rel (0) target = $region5
    $region4: #{tpu_custom_call.1} parent=1 // pred_region
      %14 = vsyncadd [#allocation3], 0
      %s15 = sshll.u32 %s0, 4
      %s16 = int_to_ptr.hbm [resolvable:$true] %s15
      %s17 = sshll.u32 [#allocation2], 4
      %s18 = int_to_ptr.vmem [resolvable:$true] %s17
      %23 = dma.hbm_to_vmem [thread:$0]  %s16, 1024, %s18, [#allocation3], 64, 64, 4
    $region5: #{tpu_custom_call.1} parent=1 // pred_fallthru
      _
    // Predicated region
    $region6: #{tpu_custom_call.1} parent=1 // pred_check
      _
    $region7: #{tpu_custom_call.1} parent=1 // pred_check_branch
      %25 = sbr.rel (0) target = $region9
    $region8: #{tpu_custom_call.1} parent=1 // pred_region
      %27 = vsyncadd [#allocation6], 0
      %s28 = sshll.u32 %s1, 4
      %s29 = int_to_ptr.hbm [resolvable:$true] %s28
      %s30 = sshll.u32 [#allocation5], 4
      %s31 = int_to_ptr.vmem [resolvable:$true] %s30
      %36 = dma.hbm_to_vmem [thread:$0]  %s29, 1024, %s31, [#allocation6], 64, 64, 4
    $region9: #{tpu_custom_call.1} parent=1 // pred_fallthru
      _
    // Predicated region
    $region10: #{tpu_custom_call.1} parent=1 // pred_check
      _
    $region11: #{tpu_custom_call.1} parent=1 // pred_check_branch
      %38 = sbr.rel (0) target = $region13
    $region12: #{tpu_custom_call.1} parent=1 // pred_region
      _
    $region13: #{tpu_custom_call.1} parent=1 // pred_fallthru
      _
    // Predicated region
    $region14: #{tpu_custom_call.1} parent=1 // pred_check
      _
    $region15: #{tpu_custom_call.1} parent=1 // pred_check_branch
      %40 = sbr.rel (0) target = $region17
    $region16: #{tpu_custom_call.1} parent=1 // pred_region
      %42 = dma.done [#allocation3], 1024
    $region17: #{tpu_custom_call.1} parent=1 // pred_fallthru
      _
    // Predicated region
    $region18: #{tpu_custom_call.1} parent=1 // pred_check
      _
    $region19: #{tpu_custom_call.1} parent=1 // pred_check_branch
      %44 = sbr.rel (0) target = $region21
    $region20: #{tpu_custom_call.1} parent=1 // pred_region
      %46 = dma.done [#allocation6], 1024
    $region21: #{tpu_custom_call.1} parent=1 // pred_fallthru
      _
    %p47 = scmp.eq.s32.totalorder 0, 0
    // Predicated region
    $region22: #{tpu_custom_call.1} parent=1 // pred_check
      %p48 = pneg %p47
    $region23: #{tpu_custom_call.1} parent=1 // pred_check_branch
      %50 = sbr.rel (%p48) target = $region25
    $region24: #{tpu_custom_call.1} parent=1 // pred_region
      %51 = vst [vmem:[#allocation7] sm:$0xff] 0.0
      %52 = vst [vmem:[#allocation7 + $0x8] sm:$0xff] 0.0
      %53 = vst [vmem:[#allocation7 + $0x10] sm:$0xff] 0.0
      %54 = vst [vmem:[#allocation7 + $0x18] sm:$0xff] 0.0
      %55 = vst [vmem:[#allocation7 + $0x20] sm:$0xff] 0.0
      %56 = vst [vmem:[#allocation7 + $0x28] sm:$0xff] 0.0
      %57 = vst [vmem:[#allocation7 + $0x30] sm:$0xff] 0.0
      %58 = vst [vmem:[#allocation7 + $0x38] sm:$0xff] 0.0
      %59 = vst [vmem:[#allocation7 + $0x40] sm:$0xff] 0.0
      %60 = vst [vmem:[#allocation7 + $0x48] sm:$0xff] 0.0
      %61 = vst [vmem:[#allocation7 + $0x50] sm:$0xff] 0.0
      %62 = vst [vmem:[#allocation7 + $0x58] sm:$0xff] 0.0
      %63 = vst [vmem:[#allocation7 + $0x60] sm:$0xff] 0.0
      %64 = vst [vmem:[#allocation7 + $0x68] sm:$0xff] 0.0
      %65 = vst [vmem:[#allocation7 + $0x70] sm:$0xff] 0.0
      %66 = vst [vmem:[#allocation7 + $0x78] sm:$0xff] 0.0
    $region25: #{tpu_custom_call.1} parent=1 // pred_fallthru
      _
    %s67 = smul.u32 0, 128
    %s68 = sshra.s32 %s67, 3
    %s69 = sand.u32 %s67, 7
    %s70 = smul.addr %s68, 4
    %s71 = scalar_lea.vmem [#allocation5], %s70
    %v72 = vld [vmem:[%s71] sm:$0xf]
    %v73 = vld [vmem:[%s71 + $0x4] sm:$0xf]
    %v74 = vld [vmem:[%s71 + $0x8] sm:$0xf]
    %v75 = vld [vmem:[%s71 + $0xc] sm:$0xf]
    %v76 = vld [vmem:[%s71 + $0x10] sm:$0xf]
    %v77 = vld [vmem:[%s71 + $0x14] sm:$0xf]
    %v78 = vld [vmem:[%s71 + $0x18] sm:$0xf]
    %v79 = vld [vmem:[%s71 + $0x1c] sm:$0xf]
    %v80 = vld [vmem:[%s71 + $0x20] sm:$0xf]
    %v81 = vld [vmem:[%s71 + $0x24] sm:$0xf]
    %v82 = vld [vmem:[%s71 + $0x28] sm:$0xf]
    %v83 = vld [vmem:[%s71 + $0x2c] sm:$0xf]
    %v84 = vld [vmem:[%s71 + $0x30] sm:$0xf]
    %v85 = vld [vmem:[%s71 + $0x34] sm:$0xf]
    %v86 = vld [vmem:[%s71 + $0x38] sm:$0xf]
    %v87 = vld [vmem:[%s71 + $0x3c] sm:$0xf]
    %v88 = vld [vmem:[#allocation7] sm:$0xff]
    %v89 = vld [vmem:[#allocation7 + $0x8] sm:$0xff]
    %v90 = vld [vmem:[#allocation7 + $0x10] sm:$0xff]
    %v91 = vld [vmem:[#allocation7 + $0x18] sm:$0xff]
    %v92 = vld [vmem:[#allocation7 + $0x20] sm:$0xff]
    %v93 = vld [vmem:[#allocation7 + $0x28] sm:$0xff]
    %v94 = vld [vmem:[#allocation7 + $0x30] sm:$0xff]
    %v95 = vld [vmem:[#allocation7 + $0x38] sm:$0xff]
    %v96 = vld [vmem:[#allocation7 + $0x40] sm:$0xff]
    %v97 = vld [vmem:[#allocation7 + $0x48] sm:$0xff]
    %v98 = vld [vmem:[#allocation7 + $0x50] sm:$0xff]
    %v99 = vld [vmem:[#allocation7 + $0x58] sm:$0xff]
    %v100 = vld [vmem:[#allocation7 + $0x60] sm:$0xff]
    %v101 = vld [vmem:[#allocation7 + $0x68] sm:$0xff]
    %v102 = vld [vmem:[#allocation7 + $0x70] sm:$0xff]
    %v103 = vld [vmem:[#allocation7 + $0x78] sm:$0xff]
    %v104 = vld [vmem:[#allocation2] sm:$0xf]
    %v105 = vld [vmem:[#allocation2 + $0x4] sm:$0xf]
    %v106 = vld [vmem:[#allocation2 + $0x8] sm:$0xf]
    %v107 = vld [vmem:[#allocation2 + $0xc] sm:$0xf]
    %v108 = vld [vmem:[#allocation2 + $0x10] sm:$0xf]
    %v109 = vld [vmem:[#allocation2 + $0x14] sm:$0xf]
    %v110 = vld [vmem:[#allocation2 + $0x18] sm:$0xf]
    %v111 = vld [vmem:[#allocation2 + $0x1c] sm:$0xf]
    %v112 = vld [vmem:[#allocation2 + $0x20] sm:$0xf]
    %v113 = vld [vmem:[#allocation2 + $0x24] sm:$0xf]
    %v114 = vld [vmem:[#allocation2 + $0x28] sm:$0xf]
    %v115 = vld [vmem:[#allocation2 + $0x2c] sm:$0xf]
    %v116 = vld [vmem:[#allocation2 + $0x30] sm:$0xf]
    %v117 = vld [vmem:[#allocation2 + $0x34] sm:$0xf]
    %v118 = vld [vmem:[#allocation2 + $0x38] sm:$0xf]
    %v119 = vld [vmem:[#allocation2 + $0x3c] sm:$0xf]
    %v136 = vunpack.c.l.b16 %v104
    %v137 = vunpack.c.l.b16 %v105
    %v138 = vunpack.c.l.b16 %v106
    %v139 = vunpack.c.l.b16 %v107
    %v140 = vunpack.c.l.b16 %v108
    %v141 = vunpack.c.l.b16 %v109
    %v142 = vunpack.c.l.b16 %v110
    %v143 = vunpack.c.l.b16 %v111
    %v144 = vunpack.c.l.b16 %v112
    %v145 = vunpack.c.l.b16 %v113
    %v146 = vunpack.c.l.b16 %v114
    %v147 = vunpack.c.l.b16 %v115
    %v148 = vunpack.c.l.b16 %v116
    %v149 = vunpack.c.l.b16 %v117
    %v150 = vunpack.c.l.b16 %v118
    %v151 = vunpack.c.l.b16 %v119
    %v152 = vpack.c.b16 %v137, %v136
    %v153 = vpack.c.b16 %v139, %v138
    %v154 = vpack.c.b16 %v141, %v140
    %v155 = vpack.c.b16 %v143, %v142
    %v156 = vpack.c.b16 %v145, %v144
    %v157 = vpack.c.b16 %v147, %v146
    %v158 = vpack.c.b16 %v149, %v148
    %v159 = vpack.c.b16 %v151, %v150
    %v184 = vunpack.c.l.b16 %v72
    %v185 = vunpack.c.l.b16 %v73
    %v186 = vunpack.c.l.b16 %v74
    %v187 = vunpack.c.l.b16 %v75
    %v188 = vunpack.c.l.b16 %v76
    %v189 = vunpack.c.l.b16 %v77
    %v190 = vunpack.c.l.b16 %v78
    %v191 = vunpack.c.l.b16 %v79
    %v192 = vunpack.c.l.b16 %v80
    %v193 = vunpack.c.l.b16 %v81
    %v194 = vunpack.c.l.b16 %v82
    %v195 = vunpack.c.l.b16 %v83
    %v196 = vunpack.c.l.b16 %v84
    %v197 = vunpack.c.l.b16 %v85
    %v198 = vunpack.c.l.b16 %v86
    %v199 = vunpack.c.l.b16 %v87
    %v200 = vpack.c.b16 %v185, %v184
    %v201 = vpack.c.b16 %v187, %v186
    %v202 = vpack.c.b16 %v189, %v188
    %v203 = vpack.c.b16 %v191, %v190
    %v204 = vpack.c.b16 %v193, %v192
    %v205 = vpack.c.b16 %v195, %v194
    %v206 = vpack.c.b16 %v197, %v196
    %v207 = vpack.c.b16 %v199, %v198
    %216 = vmatpush.bf16.msra.mxu0 %v207
    %217 = vmatpush.bf16.msra.mxu0 %v206
    %218 = vmatpush.bf16.msra.mxu0 %v205
    %219 = vmatpush.bf16.msra.mxu0 %v204
    %220 = vmatpush.bf16.msra.mxu0 %v203
    %221 = vmatpush.bf16.msra.mxu0 %v202
    %222 = vmatpush.bf16.msra.mxu0 %v201
    %223 = vmatpush.bf16.msra.mxu0 %v200
    %224 = vmatmul.bf16.gmra.mxu0 %v152
    %v225 = vpop.f32.mrf.mxu0
    %v226 = vadd.f32 0.0, %v225
    %v227 = vpop.f32.mrf.mxu0
    %v228 = vadd.f32 0.0, %v227
    %229 = vmatmul.bf16.gmra.mxu0 %v153
    %v230 = vpop.f32.mrf.mxu0
    %v231 = vadd.f32 0.0, %v230
    %v232 = vpop.f32.mrf.mxu0
    %v233 = vadd.f32 0.0, %v232
    %234 = vmatmul.bf16.gmra.mxu0 %v154
    %v235 = vpop.f32.mrf.mxu0
    %v236 = vadd.f32 0.0, %v235
    %v237 = vpop.f32.mrf.mxu0
    %v238 = vadd.f32 0.0, %v237
    %239 = vmatmul.bf16.gmra.mxu0 %v155
    %v240 = vpop.f32.mrf.mxu0
    %v241 = vadd.f32 0.0, %v240
    %v242 = vpop.f32.mrf.mxu0
    %v243 = vadd.f32 0.0, %v242
    %244 = vmatmul.bf16.gmra.mxu0 %v156
    %v245 = vpop.f32.mrf.mxu0
    %v246 = vadd.f32 0.0, %v245
    %v247 = vpop.f32.mrf.mxu0
    %v248 = vadd.f32 0.0, %v247
    %249 = vmatmul.bf16.gmra.mxu0 %v157
    %v250 = vpop.f32.mrf.mxu0
    %v251 = vadd.f32 0.0, %v250
    %v252 = vpop.f32.mrf.mxu0
    %v253 = vadd.f32 0.0, %v252
    %254 = vmatmul.bf16.gmra.mxu0 %v158
    %v255 = vpop.f32.mrf.mxu0
    %v256 = vadd.f32 0.0, %v255
    %v257 = vpop.f32.mrf.mxu0
    %v258 = vadd.f32 0.0, %v257
    %259 = vmatmul.bf16.gmra.mxu0 %v159
    %v260 = vpop.f32.mrf.mxu0
    %v261 = vadd.f32 0.0, %v260
    %v262 = vpop.f32.mrf.mxu0
    %v263 = vadd.f32 0.0, %v262
    %264 = vdwg.mxu0
    %v265 = vadd.f32 %v88, %v226
    %v266 = vadd.f32 %v89, %v228
    %v267 = vadd.f32 %v90, %v231
    %v268 = vadd.f32 %v91, %v233
    %v269 = vadd.f32 %v92, %v236
    %v270 = vadd.f32 %v93, %v238
    %v271 = vadd.f32 %v94, %v241
    %v272 = vadd.f32 %v95, %v243
    %v273 = vadd.f32 %v96, %v246
    %v274 = vadd.f32 %v97, %v248
    %v275 = vadd.f32 %v98, %v251
    %v276 = vadd.f32 %v99, %v253
    %v277 = vadd.f32 %v100, %v256
    %v278 = vadd.f32 %v101, %v258
    %v279 = vadd.f32 %v102, %v261
    %v280 = vadd.f32 %v103, %v263
    %281 = vst [vmem:[#allocation7] sm:$0xff] %v265
    %282 = vst [vmem:[#allocation7 + $0x8] sm:$0xff] %v266
    %283 = vst [vmem:[#allocation7 + $0x10] sm:$0xff] %v267
    %284 = vst [vmem:[#allocation7 + $0x18] sm:$0xff] %v268
    %285 = vst [vmem:[#allocation7 + $0x20] sm:$0xff] %v269
    %286 = vst [vmem:[#allocation7 + $0x28] sm:$0xff] %v270
    %287 = vst [vmem:[#allocation7 + $0x30] sm:$0xff] %v271
    %288 = vst [vmem:[#allocation7 + $0x38] sm:$0xff] %v272
    %289 = vst [vmem:[#allocation7 + $0x40] sm:$0xff] %v273
    %290 = vst [vmem:[#allocation7 + $0x48] sm:$0xff] %v274
    %291 = vst [vmem:[#allocation7 + $0x50] sm:$0xff] %v275
    %292 = vst [vmem:[#allocation7 + $0x58] sm:$0xff] %v276
    %293 = vst [vmem:[#allocation7 + $0x60] sm:$0xff] %v277
    %294 = vst [vmem:[#allocation7 + $0x68] sm:$0xff] %v278
    %295 = vst [vmem:[#allocation7 + $0x70] sm:$0xff] %v279
    %296 = vst [vmem:[#allocation7 + $0x78] sm:$0xff] %v280
    // Predicated region
    $region26: #{tpu_custom_call.1} parent=1 // pred_check
      %p297 = pneg %p47
    $region27: #{tpu_custom_call.1} parent=1 // pred_check_branch
      %299 = sbr.rel (%p297) target = $region29
    $region28: #{tpu_custom_call.1} parent=1 // pred_region
      %v300 = vld [vmem:[#allocation7] sm:$0xff]
      %v301 = vld [vmem:[#allocation7 + $0x8] sm:$0xff]
      %v302 = vld [vmem:[#allocation7 + $0x10] sm:$0xff]
      %v303 = vld [vmem:[#allocation7 + $0x18] sm:$0xff]
      %v304 = vld [vmem:[#allocation7 + $0x20] sm:$0xff]
      %v305 = vld [vmem:[#allocation7 + $0x28] sm:$0xff]
      %v306 = vld [vmem:[#allocation7 + $0x30] sm:$0xff]
      %v307 = vld [vmem:[#allocation7 + $0x38] sm:$0xff]
      %v308 = vld [vmem:[#allocation7 + $0x40] sm:$0xff]
      %v309 = vld [vmem:[#allocation7 + $0x48] sm:$0xff]
      %v310 = vld [vmem:[#allocation7 + $0x50] sm:$0xff]
      %v311 = vld [vmem:[#allocation7 + $0x58] sm:$0xff]
      %v312 = vld [vmem:[#allocation7 + $0x60] sm:$0xff]
      %v313 = vld [vmem:[#allocation7 + $0x68] sm:$0xff]
      %v314 = vld [vmem:[#allocation7 + $0x70] sm:$0xff]
      %v315 = vld [vmem:[#allocation7 + $0x78] sm:$0xff]
      %v316 = vld [vmem:[%s2] sm:$0x1]
      %v318 = vperm.slane %v316, 0
      %v320 = vadd.f32 %v300, %v318
      %v321 = vadd.f32 %v301, %v318
      %v322 = vadd.f32 %v302, %v318
      %v323 = vadd.f32 %v303, %v318
      %v324 = vadd.f32 %v304, %v318
      %v325 = vadd.f32 %v305, %v318
      %v326 = vadd.f32 %v306, %v318
      %v327 = vadd.f32 %v307, %v318
      %v328 = vadd.f32 %v308, %v318
      %v329 = vadd.f32 %v309, %v318
      %v330 = vadd.f32 %v310, %v318
      %v331 = vadd.f32 %v311, %v318
      %v332 = vadd.f32 %v312, %v318
      %v333 = vadd.f32 %v313, %v318
      %v334 = vadd.f32 %v314, %v318
      %v335 = vadd.f32 %v315, %v318
      %336 = vst [vmem:[#allocation7] sm:$0xff] %v320
      %337 = vst [vmem:[#allocation7 + $0x8] sm:$0xff] %v321
      %338 = vst [vmem:[#allocation7 + $0x10] sm:$0xff] %v322
      %339 = vst [vmem:[#allocation7 + $0x18] sm:$0xff] %v323
      %340 = vst [vmem:[#allocation7 + $0x20] sm:$0xff] %v324
      %341 = vst [vmem:[#allocation7 + $0x28] sm:$0xff] %v325
      %342 = vst [vmem:[#allocation7 + $0x30] sm:$0xff] %v326
      %343 = vst [vmem:[#allocation7 + $0x38] sm:$0xff] %v327
      %344 = vst [vmem:[#allocation7 + $0x40] sm:$0xff] %v328
      %345 = vst [vmem:[#allocation7 + $0x48] sm:$0xff] %v329
      %346 = vst [vmem:[#allocation7 + $0x50] sm:$0xff] %v330
      %347 = vst [vmem:[#allocation7 + $0x58] sm:$0xff] %v331
      %348 = vst [vmem:[#allocation7 + $0x60] sm:$0xff] %v332
      %349 = vst [vmem:[#allocation7 + $0x68] sm:$0xff] %v333
      %350 = vst [vmem:[#allocation7 + $0x70] sm:$0xff] %v334
      %351 = vst [vmem:[#allocation7 + $0x78] sm:$0xff] %v335
    $region29: #{tpu_custom_call.1} parent=1 // pred_fallthru
      _
    // Predicated region
    $region30: #{tpu_custom_call.1} parent=1 // pred_check
      _
    $region31: #{tpu_custom_call.1} parent=1 // pred_check_branch
      %353 = sbr.rel (0) target = $region33
    $region32: #{tpu_custom_call.1} parent=1 // pred_region
      %355 = vsyncadd [#allocation4], 0
      %s356 = sshll.u32 [#allocation7], 4
      %s357 = int_to_ptr.vmem [resolvable:$true] %s356
      %s358 = sshll.u32 %s3, 4
      %s359 = int_to_ptr.hbm [resolvable:$true] %s358
      %364 = dma.vmem_to_hbm [thread:$0]  %s357, 2048, %s359, [#allocation4], 128, 128, 8
    $region33: #{tpu_custom_call.1} parent=1 // pred_fallthru
      _
    // Predicated region
    $region34: #{tpu_custom_call.1} parent=1 // pred_check
      _
    $region35: #{tpu_custom_call.1} parent=1 // pred_check_branch
      %366 = sbr.rel (0) target = $region37
    $region36: #{tpu_custom_call.1} parent=1 // pred_region
      %368 = dma.done [#allocation4], 2048
    $region37: #{tpu_custom_call.1} parent=1 // pred_fallthru
      _
    %369 = vsyncpa [#allocation3], 1
    %370 = vsyncpa [#allocation6], 1
    %371 = vsyncpa [#allocation4], 1

</llo_original>
